<compile_context>
chip_gen: v5e
topology: v5e:2x2
jax: 0.10.0
libtpu: 0.0.40
codegen_flags: <defaults>
</compile_context>

<pallas_src>
import jax
import jax.numpy as jnp
from jax.experimental import pallas as pl
from jax.experimental.pallas import tpu as pltpu


def _proj_kernel(x_ref, q_ref, qt_ref, o_ref):
    # x_ref : (tile_m, F) tile of flattened hidden states
    # q_ref : (F, r)  orthonormal probe (loop-invariant)
    # qt_ref: (r, F)  its transpose, precomputed in the wrapper (loop-invariant)
    x = x_ref[...]
    # out = (x @ Q) @ Q^T, accumulated in f32 on the MXU.
    t = jnp.dot(x, q_ref[...], preferred_element_type=jnp.float32)      # (tile_m, r)
    o_ref[...] = jnp.dot(t, qt_ref[...],
                         preferred_element_type=jnp.float32).astype(o_ref.dtype)


def _round_up(v, m):
    return ((v + m - 1) // m) * m


def low_rank_projection(x, q_orth, *, tile_m=2048):
    """x: (B, S, F), q_orth: (F, r) float32 with orthonormal columns.

    Returns x projected onto span(q_orth): out[b, s] = q_orth @ q_orth.T @ x[b, s].
    Note: for lane-dense stores, production F should be a multiple of 128.
    """
    B, S, F = x.shape
    r = q_orth.shape[1]
    xf = x.reshape(-1, F)
    n = xf.shape[0]

    itemsize = jnp.dtype(x.dtype).itemsize
    sub = max(8, 32 // itemsize)          # sublane multiple: 8 (f32), 16 (bf16)

    # Chip-aware VMEM cap (64 MiB/TC on v7x, 128 MiB on v5e/v6e).
    try:
        vmem_cap = int(pltpu.get_tpu_info().vmem_capacity_bytes)
    except Exception:
        vmem_cap = 64 << 20               # conservative fallback (v7x per-TC)

    # x tile + out tile are each double-buffered by the pipeline -> 4 tile
    # buffers; keep them within ~70% of physical VMEM.
    probe_bytes = 2 * F * r * 4           # Q and Q^T, single-buffered
    budget = int(0.70 * vmem_cap) - probe_bytes
    max_tile = max(sub, (budget // (4 * F * itemsize)) // sub * sub)
    tile_m = int(min(int(tile_m), max_tile))

    # Clamp to the (sublane-rounded) row count, and keep grid_m >= 2 whenever
    # possible so the "parallel" grid axis can shard across both v7x TCs.
    tile_m = min(tile_m, _round_up(n, sub))
    if n >= 2 * sub:
        tile_m = min(tile_m, _round_up(pl.cdiv(n, 2), sub))
    tile_m = max(sub, (tile_m // sub) * sub)

    grid_m = pl.cdiv(n, tile_m)           # ragged last block masked by Pallas

    vmem_est = 4 * tile_m * F * itemsize + probe_bytes + (4 << 20)
    vmem_limit = int(min(max(vmem_est, 32 << 20), vmem_cap))

    qt = q_orth.T                          # computed once, outside the kernel

    cost = pl.CostEstimate(
        flops=4 * n * F * r,               # two (n,F)x(F,r)-sized matmuls
        transcendentals=0,
        bytes_accessed=2 * n * F * itemsize + 2 * F * r * 4,
    )

    out = pl.pallas_call(
        _proj_kernel,
        out_shape=jax.ShapeDtypeStruct((n, F), x.dtype),
        grid_spec=pltpu.PrefetchScalarGridSpec(
            num_scalar_prefetch=0,
            grid=(grid_m,),
            in_specs=[
                pl.BlockSpec((tile_m, F), lambda i: (i, 0)),          # x row tile
                pl.BlockSpec((F, r), lambda i: (0, 0),
                             pipeline_mode=pl.Buffered(1)),           # Q (invariant)
                pl.BlockSpec((r, F), lambda i: (0, 0),
                             pipeline_mode=pl.Buffered(1)),           # Q^T (invariant)
            ],
            out_specs=pl.BlockSpec((tile_m, F), lambda i: (i, 0)),
        ),
        compiler_params=pltpu.CompilerParams(
            dimension_semantics=("parallel",),    # megacore split on v7x
            vmem_limit_bytes=vmem_limit,
        ),
        cost_estimate=cost,
    )(xf, q_orth, qt)

    return out.reshape(B, S, F)


def make_orth_probe(key, num_features, rank):
    """Mirror nn.Parameter(...).uniform_(-0.05, 0.05) per rank vector, stacked
    along dim 1 and orthonormalized (torch.qr(A)[0] equivalent)."""
    keys = jax.random.split(key, rank)
    params = [
        jax.random.uniform(k, (num_features,), jnp.float32, minval=-0.05, maxval=0.05)
        for k in keys
    ]
    a = jnp.stack(params, axis=1)                 # (num_features, rank)
    q, _ = jnp.linalg.qr(a)                       # reduced QR -> (F, r)
    return q.astype(jnp.float32)


if __name__ == "__main__":
    key = jax.random.PRNGKey(0)
    k_param, k_x = jax.random.split(key)

    # Small shapes; F kept at 128 so the output stays lane-dense on TPU.
    batch, seq, num_features, rank = 2, 8, 128, 4

    q_orth = make_orth_probe(k_param, num_features, rank)
    x = jax.random.normal(k_x, (batch, seq, num_features), jnp.float32)

    out = low_rank_projection(x, q_orth)
    out = jax.block_until_ready(out)

    # Reference check in plain JAX (Q Q^T is invariant to QR sign ambiguity).
    ref = jnp.einsum("bsf,fr,gr->bsg", x, q_orth, q_orth)
    assert out.shape == (batch, seq, num_features)
    assert jnp.allclose(out, ref, atol=1e-5, rtol=1e-5)

    print("KERNEL_OK")
</pallas_src>

<mosaic_0001>
module attributes {stable_mosaic.version = 11 : i64} {
  func.func @_proj_kernel(%arg0: i32, %arg1: memref<8x128xf32, #tpu.memory_space<vmem>>, %arg2: memref<128x4xf32, #tpu.memory_space<vmem>>, %arg3: memref<4x128xf32, #tpu.memory_space<vmem>>, %arg4: memref<8x128xf32, #tpu.memory_space<vmem>>) attributes {dimension_semantics = [#tpu.dimension_semantics<parallel>], iteration_bounds = array<i64: 2>, scalar_prefetch = 0 : i64, scratch_operands = 0 : i64, tpu.core_type = #tpu.core_type<tc>, window_params = [{transform_indices = @transform_0, window_bounds = array<i64: 8, 128>}, {pipeline_mode = #tpu.pipeline_mode<synchronous>, transform_indices = @transform_1, window_bounds = array<i64: 128, 4>}, {pipeline_mode = #tpu.pipeline_mode<synchronous>, transform_indices = @transform_2, window_bounds = array<i64: 4, 128>}, {transform_indices = @transform_3, window_bounds = array<i64: 8, 128>}]} {
    %c0 = arith.constant 0 : index
    %c0_0 = arith.constant 0 : index
    %0 = vector.load %arg1[%c0, %c0_0] : memref<8x128xf32, #tpu.memory_space<vmem>>, vector<8x128xf32>
    %c0_1 = arith.constant 0 : index
    %c0_2 = arith.constant 0 : index
    %1 = vector.load %arg2[%c0_1, %c0_2] : memref<128x4xf32, #tpu.memory_space<vmem>>, vector<128x4xf32>
    %cst = arith.constant dense<0.000000e+00> : vector<8x4xf32>
    %2 = tpu.matmul %0, %1, %cst {dimension_numbers = #tpu.dot_dimension_numbers<[1], [0], [0], [1], [0, 0, 1, 1], [], []>} : vector<8x128xf32>, vector<128x4xf32>, vector<8x4xf32> -> vector<8x4xf32>
    %c0_3 = arith.constant 0 : index
    %c0_4 = arith.constant 0 : index
    %3 = vector.load %arg3[%c0_3, %c0_4] : memref<4x128xf32, #tpu.memory_space<vmem>>, vector<4x128xf32>
    %cst_5 = arith.constant dense<0.000000e+00> : vector<8x128xf32>
    %4 = tpu.matmul %2, %3, %cst_5 {dimension_numbers = #tpu.dot_dimension_numbers<[1], [0], [0], [1], [0, 0, 1, 1], [], []>} : vector<8x4xf32>, vector<4x128xf32>, vector<8x128xf32> -> vector<8x128xf32>
    %c0_6 = arith.constant 0 : index
    %c0_7 = arith.constant 0 : index
    %5 = vector.load %arg4[%c0_6, %c0_7] : memref<8x128xf32, #tpu.memory_space<vmem>>, vector<8x128xf32>
    tpu.vector_store %arg4[%c0_6, %c0_7], %4 {strides = array<i32>} : memref<8x128xf32, #tpu.memory_space<vmem>>, vector<8x128xf32>,
    return
  }
  func.func @transform_0(%arg0: i32) -> (i32, i32) {
    %c0_i32 = arith.constant 0 : i32
    %c0_i32_0 = arith.constant 0 : i32
    return %arg0, %c0_i32 : i32, i32
  }
  func.func @transform_1(%arg0: i32) -> (i32, i32) {
    %c0_i32 = arith.constant 0 : i32
    %c0_i32_0 = arith.constant 0 : i32
    %c0_i32_1 = arith.constant 0 : i32
    return %c0_i32, %c0_i32_0 : i32, i32
  }
  func.func @transform_2(%arg0: i32) -> (i32, i32) {
    %c0_i32 = arith.constant 0 : i32
    %c0_i32_0 = arith.constant 0 : i32
    %c0_i32_1 = arith.constant 0 : i32
    return %c0_i32, %c0_i32_0 : i32, i32
  }
  func.func @transform_3(%arg0: i32) -> (i32, i32) {
    %c0_i32 = arith.constant 0 : i32
    %c0_i32_0 = arith.constant 0 : i32
    return %arg0, %c0_i32 : i32, i32
  }
}

</mosaic_0001>

<llo_original>
// kernel: tpu_custom_call.1
$region0: #{tpu_custom_call.1}
  #allocation0 [shape = 'u32[]', space=smem, size = 0x4, offset = 0x4, fixed_abs, tag = 'smem constant byte address 0x4 - core index']
  #allocation1 [shape = 'u32[72,128]{1,0:T(1,128)}', space=vmem, size = 0x9000, scoped, tag = 'internal scratch']
  %s0 = inlined_call_operand.vmem [shape: f32[16,128], index: 0, kind: input, shape index: {}]
  %s1 = inlined_call_operand.vmem [shape: f32[128,4], index: 1, kind: input, shape index: {}]
  %s2 = inlined_call_operand.vmem [shape: f32[4,128], index: 2, kind: input, shape index: {}]
  %s3 = inlined_call_operand.hbm [shape: f32[16,128], index: 3, kind: output, shape index: {}]
  %s4 = sld [smem:[#allocation0]]
  $region45: #{tpu_custom_call.1} parent=0
    _
  %s6 = ssub.s32 1, %s4
  %s7 = scalar_select 0, %s6, %s4
  $region1: #{tpu_custom_call.1} parent=0
    #allocation2 [shape = 'u8[8192]{0}', space=vmem, size = 0x2000, scoped, tag = 'output window, operand 0']
    #allocation3 [shape = 's32[2]{0}', space=sflag, size = 0x8, scoped, tag = 'scoped memory for tpu_custom_call.1']
    %8 = vsyncpa [#allocation3], 0
    %s9 = scalar_lea.sflag [#allocation3], 1
    %10 = vsyncpa %s9, 0
    loop: start=0, step=1, limit=4
    $region2: #{tpu_custom_call.1} parent=1 // loop_pre_header
      _
    $region3: #{tpu_custom_call.1} parent=1 // loop_header
      %s12 = sphi 0, %s16
      %p13 = scmp.ge.s32.totalorder %s12, 4
      %s22 = sphi 0, %s24
      %s25 = sphi 0, %s22
      %s26 = sphi 0, %s25
      %s42 = sphi 0, %s26
      %s46 = sphi 0, %s46
      %s48 = sphi 0, %s46
      %s49 = sphi 0, %s48
      %s63 = sphi 0, %s49
      %s67 = sphi 0, %s67
      %s69 = sphi 0, %s67
      %s70 = sphi 0, %s69
      %s84 = sphi 0, %s70
      %s90 = sphi 0, %s92
      %s93 = sphi 0, %s90
      %s94 = sphi 0, %s93
      %s110 = sphi 0, %s94
    $region4: #{tpu_custom_call.1} parent=1 // loop_header_branch
      %15 = sbr.rel (%p13) target = $region8
    $region5: #{tpu_custom_call.1} parent=1 // loop_body
      %s17 = ssub.s32 %s12, 1
      %s18 = ssub.s32 %s12, 2
      %s19 = sadd.s32 %s12, 1
      %s20 = ssub.s32 %s12, %s19
      %p21 = scmp.eq.s32.totalorder %s20, 0
      %s23 = sadd.s32 %s22, 1
      %s24 = scalar_select %p21, %s22, %s23
      %p27 = pneg %p21
      %p28 = scmp.eq.s32.totalorder %s12, 1
      %p29 = por %p27, %p28
      %p30 = scmp.ne.s32.totalorder %s22, %s25
      %p31 = scmp.eq.s32.totalorder %s12, 0
      %p32 = por %p30, %p31
      %p33 = scmp.ne.s32.totalorder %s22, %s25
      %p34 = scmp.eq.s32.totalorder %s17, 1
      %p35 = por %p33, %p34
      %p36 = scmp.ne.s32.totalorder %s25, %s26
      %p37 = scmp.eq.s32.totalorder %s17, 0
      %p38 = por %p36, %p37
      %p39 = scmp.ne.s32.totalorder %s25, %s26
      %p40 = scmp.eq.s32.totalorder %s18, 1
      %p41 = por %p39, %p40
      %p43 = scmp.ne.s32.totalorder %s26, %s42
      %p44 = scmp.eq.s32.totalorder %s18, 0
      %p45 = por %p43, %p44
      %s47 = sadd.s32 %s46, 1
      %p50 = scmp.eq.s32.totalorder %s12, 1
      %p51 = scmp.ne.s32.totalorder %s46, %s48
      %p52 = scmp.eq.s32.totalorder %s12, 0
      %p53 = por %p51, %p52
      %p54 = scmp.ne.s32.totalorder %s46, %s48
      %p55 = scmp.eq.s32.totalorder %s17, 1
      %p56 = por %p54, %p55
      %p57 = scmp.ne.s32.totalorder %s48, %s49
      %p58 = scmp.eq.s32.totalorder %s17, 0
      %p59 = por %p57, %p58
      %p60 = scmp.ne.s32.totalorder %s48, %s49
      %p61 = scmp.eq.s32.totalorder %s18, 1
      %p62 = por %p60, %p61
      %p64 = scmp.ne.s32.totalorder %s49, %s63
      %p65 = scmp.eq.s32.totalorder %s18, 0
      %p66 = por %p64, %p65
      %s68 = sadd.s32 %s67, 1
      %p71 = scmp.eq.s32.totalorder %s12, 1
      %p72 = scmp.ne.s32.totalorder %s67, %s69
      %p73 = scmp.eq.s32.totalorder %s12, 0
      %p74 = por %p72, %p73
      %p75 = scmp.ne.s32.totalorder %s67, %s69
      %p76 = scmp.eq.s32.totalorder %s17, 1
      %p77 = por %p75, %p76
      %p78 = scmp.ne.s32.totalorder %s69, %s70
      %p79 = scmp.eq.s32.totalorder %s17, 0
      %p80 = por %p78, %p79
      %p81 = scmp.ne.s32.totalorder %s69, %s70
      %p82 = scmp.eq.s32.totalorder %s18, 1
      %p83 = por %p81, %p82
      %p85 = scmp.ne.s32.totalorder %s70, %s84
      %p86 = scmp.eq.s32.totalorder %s18, 0
      %p87 = por %p85, %p86
      %s88 = ssub.s32 %s12, %s19
      %p89 = scmp.eq.s32.totalorder %s88, 0
      %s91 = sadd.s32 %s90, 1
      %s92 = scalar_select %p89, %s90, %s91
      %p95 = pneg %p89
      %p96 = scmp.eq.s32.totalorder %s12, 1
      %p97 = por %p95, %p96
      %p98 = scmp.ne.s32.totalorder %s90, %s93
      %p99 = scmp.eq.s32.totalorder %s12, 0
      %p100 = por %p98, %p99
      %p101 = scmp.ne.s32.totalorder %s90, %s93
      %p102 = scmp.eq.s32.totalorder %s17, 1
      %p103 = por %p101, %p102
      %p104 = scmp.ne.s32.totalorder %s93, %s94
      %p105 = scmp.eq.s32.totalorder %s17, 0
      %p106 = por %p104, %p105
      %p107 = scmp.ne.s32.totalorder %s93, %s94
      %p108 = scmp.eq.s32.totalorder %s18, 1
      %p109 = por %p107, %p108
      %p111 = scmp.ne.s32.totalorder %s94, %s110
      %p112 = scmp.eq.s32.totalorder %s18, 0
      %p113 = por %p111, %p112
      %p114 = scmp.le.s32.totalorder 1, %s12
      %p115 = scmp.lt.s32.totalorder %s12, 3
      %p116 = pnand %p114, %p115
      %p117 = pneg %p116
      // Predicated region
      $region9: #{tpu_custom_call.1} parent=5 // pred_check
        _
      $region10: #{tpu_custom_call.1} parent=5 // pred_check_branch
        %119 = sbr.rel (%p116) target = $region12
      $region11: #{tpu_custom_call.1} parent=5 // pred_region
        %s120 = ssub.s32 %s12, 1
        // Predicated region
        $region13: #{tpu_custom_call.1} parent=11 // pred_check
          %p121 = pneg %p59
        $region14: #{tpu_custom_call.1} parent=11 // pred_check_branch
          %123 = sbr.rel (%p121) target = $region16
        $region15: #{tpu_custom_call.1} parent=11 // pred_region
          _
        $region16: #{tpu_custom_call.1} parent=11 // pred_fallthru
          _
        // Predicated region
        $region17: #{tpu_custom_call.1} parent=11 // pred_check
          %p124 = pneg %p80
        $region18: #{tpu_custom_call.1} parent=11 // pred_check_branch
          %126 = sbr.rel (%p124) target = $region20
        $region19: #{tpu_custom_call.1} parent=11 // pred_region
          _
        $region20: #{tpu_custom_call.1} parent=11 // pred_fallthru
          _
      $region12: #{tpu_custom_call.1} parent=5 // pred_fallthru
        _
      %p127 = scmp.lt.s32.totalorder %s12, 2
      // Predicated region
      $region21: #{tpu_custom_call.1} parent=5 // pred_check
        %p128 = pneg %p127
      $region22: #{tpu_custom_call.1} parent=5 // pred_check_branch
        %130 = sbr.rel (%p128) target = $region24
      $region23: #{tpu_custom_call.1} parent=5 // pred_region
        // Predicated region
        $region25: #{tpu_custom_call.1} parent=23 // pred_check
          %p131 = pneg %p32
        $region26: #{tpu_custom_call.1} parent=23 // pred_check_branch
          %133 = sbr.rel (%p131) target = $region28
        $region27: #{tpu_custom_call.1} parent=23 // pred_region
          %p134 = scmp.lt.s32.totalorder %s12, 1
          %s135 = scalar_select %p134, %s12, 1
          %s136 = smul.addr %s135, 8
          %s137 = scalar_lea.vmem %s0, %s136
        $region28: #{tpu_custom_call.1} parent=23 // pred_fallthru
          _
      $region24: #{tpu_custom_call.1} parent=5 // pred_fallthru
        _
      %p138 = scmp.le.s32.totalorder 1, %s12
      %p139 = scmp.lt.s32.totalorder %s12, 3
      %p140 = pnand %p138, %p139
      %p141 = pneg %p140
      // Predicated region
      $region29: #{tpu_custom_call.1} parent=5 // pred_check
        _
      $region30: #{tpu_custom_call.1} parent=5 // pred_check_branch
        %143 = sbr.rel (%p140) target = $region32
      $region31: #{tpu_custom_call.1} parent=5 // pred_region
        %s144 = ssub.s32 %s12, 1
        %p145 = scmp.lt.s32.totalorder %s17, 1
        %s146 = scalar_select %p145, %s17, 1
        %s147 = smul.addr %s146, 8
        %s148 = scalar_lea.vmem %s0, %s147
        %p149 = pneg %p38
        %p150 = pneg %p35
        %p151 = pneg %p59
        %p152 = pneg %p56
        %p153 = pneg %p80
        %p154 = pneg %p77
        %p155 = pneg %p106
        %p156 = pneg %p103
        %s157 = sand.u32 %s93, 1
        %s158 = scalar_lea.sflag [#allocation3], %s157
        %s159 = sand.u32 %s93, 1
        %s160 = smul.addr %s159, 8
        %s161 = scalar_lea.vmem [#allocation2], %s160
        %p162 = scmp.lt.s32.totalorder %s17, 1
        %s163 = scalar_select %p162, %s17, 1
        %s164 = smul.addr %s163, 8
        %s165 = scalar_lea.vmem %s0, %s164
        %v166 = vld [vmem:[%s165] sm:$0xff]
        %v167 = vld [vmem:[%s1] sm:$0xff]
        %v168 = vld [vmem:[%s1 + $0x8] sm:$0xff]
        %v169 = vld [vmem:[%s1 + $0x10] sm:$0xff]
        %v170 = vld [vmem:[%s1 + $0x18] sm:$0xff]
        %v171 = vld [vmem:[%s1 + $0x20] sm:$0xff]
        %v172 = vld [vmem:[%s1 + $0x28] sm:$0xff]
        %v173 = vld [vmem:[%s1 + $0x30] sm:$0xff]
        %v174 = vld [vmem:[%s1 + $0x38] sm:$0xff]
        %v175 = vld [vmem:[%s1 + $0x40] sm:$0xff]
        %v176 = vld [vmem:[%s1 + $0x48] sm:$0xff]
        %v177 = vld [vmem:[%s1 + $0x50] sm:$0xff]
        %v178 = vld [vmem:[%s1 + $0x58] sm:$0xff]
        %v179 = vld [vmem:[%s1 + $0x60] sm:$0xff]
        %v180 = vld [vmem:[%s1 + $0x68] sm:$0xff]
        %v181 = vld [vmem:[%s1 + $0x70] sm:$0xff]
        %v182 = vld [vmem:[%s1 + $0x78] sm:$0xff]
        %183 = vmatpush.msra.mxu0 %v182
        %184 = vmatpush.msra.mxu0 %v181
        %185 = vmatpush.msra.mxu0 %v180
        %186 = vmatpush.msra.mxu0 %v179
        %187 = vmatpush.msra.mxu0 %v178
        %188 = vmatpush.msra.mxu0 %v177
        %189 = vmatpush.msra.mxu0 %v176
        %190 = vmatpush.msra.mxu0 %v175
        %191 = vmatpush.msra.mxu0 %v174
        %192 = vmatpush.msra.mxu0 %v173
        %193 = vmatpush.msra.mxu0 %v172
        %194 = vmatpush.msra.mxu0 %v171
        %195 = vmatpush.msra.mxu0 %v170
        %196 = vmatpush.msra.mxu0 %v169
        %197 = vmatpush.msra.mxu0 %v168
        %198 = vmatpush.msra.mxu0 %v167
        %199 = vmatmul.f32.gmra.mxu0 %v166
        %v200 = vpop.f32.mrf.mxu0
        %v201 = vadd.f32 0.0, %v200
        %202 = vdwg.mxu0
        %v203 = vld [vmem:[%s2] sm:$0xf]
        %vm204 = vcmask 31744
        %v206 = vsel %vm204, %v201, 0
        %vm208 = vcmask 1043456
        %v210 = vsel %vm208, %v203, 0
        %212 = vmatpush.msra.mxu0 0.0
        %213 = vmatpush.msra.mxu0 0.0
        %214 = vmatpush.msra.mxu0 0.0
        %215 = vmatpush.msra.mxu0 0.0
        %216 = vmatpush.msra.mxu0 0.0
        %217 = vmatpush.msra.mxu0 0.0
        %218 = vmatpush.msra.mxu0 0.0
        %219 = vmatpush.msra.mxu0 0.0
        %220 = vmatpush.msra.mxu0 0.0
        %221 = vmatpush.msra.mxu0 0.0
        %222 = vmatpush.msra.mxu0 0.0
        %223 = vmatpush.msra.mxu0 0.0
        %224 = vmatpush.msra.mxu0 0.0
        %225 = vmatpush.msra.mxu0 0.0
        %226 = vmatpush.msra.mxu0 0.0
        %227 = vmatpush.msra.mxu0 %v210
        %228 = vmatmul.f32.gmra.mxu0 %v206
        %v229 = vpop.f32.mrf.mxu0
        %v230 = vadd.f32 0.0, %v229
        %231 = vdwg.mxu0
        %232 = vst [vmem:[%s161] sm:$0xff] %v230
        %s233 = sand.u32 %s93, 1
        %s234 = scalar_lea.sflag [#allocation3], %s233
        %s235 = sand.u32 %s93, 1
        %s236 = smul.addr %s235, 8
        %s237 = scalar_lea.vmem [#allocation2], %s236
        // Predicated region
        $region33: #{tpu_custom_call.1} parent=31 // pred_check
          %p238 = pneg %p103
        $region34: #{tpu_custom_call.1} parent=31 // pred_check_branch
          %240 = sbr.rel (%p238) target = $region36
        $region35: #{tpu_custom_call.1} parent=31 // pred_region
          %242 = vsyncadd %s234, 0
          %s243 = smul.addr %s17, 8
          %s244 = scalar_lea.hbm %s3, %s243
          %s246 = sshll.u32 %s237, 4
          %s247 = int_to_ptr.vmem [resolvable:$true] %s246
          %s248 = sshll.u32 %s244, 4
          %s249 = int_to_ptr.hbm [resolvable:$true] %s248
          %251 = dma.vmem_to_hbm [thread:$0]  %s247, 128, %s249, %s234
        $region36: #{tpu_custom_call.1} parent=31 // pred_fallthru
          _
      $region32: #{tpu_custom_call.1} parent=5 // pred_fallthru
        _
      %p252 = scmp.le.s32.totalorder 2, %s12
      // Predicated region
      $region37: #{tpu_custom_call.1} parent=5 // pred_check
        %p253 = pneg %p252
      $region38: #{tpu_custom_call.1} parent=5 // pred_check_branch
        %255 = sbr.rel (%p253) target = $region40
      $region39: #{tpu_custom_call.1} parent=5 // pred_region
        %s256 = ssub.s32 %s12, 2
        // Predicated region
        $region41: #{tpu_custom_call.1} parent=39 // pred_check
          %p257 = pneg %p109
        $region42: #{tpu_custom_call.1} parent=39 // pred_check_branch
          %259 = sbr.rel (%p257) target = $region44
        $region43: #{tpu_custom_call.1} parent=39 // pred_region
          %s260 = sand.u32 %s94, 1
          %s261 = scalar_lea.sflag [#allocation3], %s260
          %s262 = sand.u32 %s94, 1
          %s263 = smul.addr %s262, 8
          %s264 = scalar_lea.vmem [#allocation2], %s263
          %266 = dma.done %s261, 128
        $region44: #{tpu_custom_call.1} parent=39 // pred_fallthru
          _
      $region40: #{tpu_custom_call.1} parent=5 // pred_fallthru
        _
    $region6: #{tpu_custom_call.1} parent=1 // loop_footer
      %s16 = sadd.s32 1, %s12
    $region7: #{tpu_custom_call.1} parent=1 // loop_footer_branch
      %11 = sbr.rel target = $region3
    $region8: #{tpu_custom_call.1} parent=1 // loop_exit
      _
    %267 = vsyncpa [#allocation3], 1
    %s268 = scalar_lea.sflag [#allocation3], 1
    %269 = vsyncpa %s268, 1

</llo_original>
